<compile_context>
chip_gen: v7x
topology: tpu7x:2x2x1
jax: 0.10.0
libtpu: 0.0.40
codegen_flags: <defaults>
</compile_context>

<pallas_src>
import functools

import jax
import jax.numpy as jnp
from jax.experimental import pallas as pl
from jax.experimental.pallas import tpu as pltpu

LANES = 128
MAX_BLOCK_ROWS = 2048   # 2048 * 128 * 4B = 1 MiB per f32 input tile
NUM_SLICES = 2          # leading "parallel" grid axis (sharded across TCs on v7x)


def _round_up(x, m):
    return ((x + m - 1) // m) * m


def _sublane_multiple(dtype):
    # Second-to-last block dim should be a multiple of 8 * (4 / itemsize)
    # (f32 -> 8, bf16 -> 16, int8/bool/fp8 -> 32).
    return max(8, 32 // jnp.dtype(dtype).itemsize)


def _soft_dice_kernel(o_ref, t_ref, num_ref, den_ref, acc_num_ref, acc_den_ref,
                      *, p, n_valid, block_rows, steps, num_full_blocks,
                      needs_mask):
    """Streaming reduction over (block_rows, 128) tiles.

    Grid: (NUM_SLICES [parallel], steps [arbitrary]).
    acc_num_ref / acc_den_ref (VMEM, (block_rows, 128) f32): per-slice running
        elementwise partial sums; reduced to scalars only in the epilogue.
    num_ref / den_ref (VMEM, (1, 8, 128) f32 per slice): per-slice partial
        numer / denor broadcast over the tile; combined in the wrapper.
    """
    c = pl.program_id(0)          # parallel slice index
    i = pl.program_id(1)          # streaming step within the slice
    gb = c * steps + i            # global block index

    @pl.when(i == 0)
    def _():
        acc_num_ref[...] = jnp.zeros_like(acc_num_ref)
        acc_den_ref[...] = jnp.zeros_like(acc_den_ref)

    def accumulate(masked):
        probs = jax.nn.sigmoid(o_ref[...].astype(jnp.float32))
        tgt = t_ref[...].astype(jnp.float32)
        if masked:
            # Only the ragged edge / over-coverage blocks pay this cost.
            row = jax.lax.broadcasted_iota(jnp.int32, (block_rows, LANES), 0)
            lane = jax.lax.broadcasted_iota(jnp.int32, (block_rows, LANES), 1)
            local = row * LANES + lane
            rem = n_valid - gb * (block_rows * LANES)   # scalar; may be <= 0
            valid = local < rem
            probs = jnp.where(valid, probs, 0.0)
            tgt = jnp.where(valid, tgt, 0.0)
        acc_num_ref[...] += probs * tgt
        if p == 1:
            acc_den_ref[...] += probs + tgt
        elif p == 2:
            acc_den_ref[...] += probs * probs + tgt * tgt
        else:
            acc_den_ref[...] += probs ** p + tgt ** p

    if needs_mask:
        @pl.when(gb < num_full_blocks)      # fully-valid tile: fast path
        def _():
            accumulate(False)

        @pl.when(gb >= num_full_blocks)     # ragged / over-coverage tile
        def _():
            accumulate(True)
    else:
        accumulate(False)

    @pl.when(i == steps - 1)
    def _():
        numer = jnp.sum(acc_num_ref[...])
        denor = jnp.sum(acc_den_ref[...])
        num_ref[...] = jnp.full(num_ref.shape, numer, jnp.float32)
        den_ref[...] = jnp.full(den_ref.shape, denor, jnp.float32)


@functools.partial(jax.jit, static_argnames=("p", "smooth"))
def soft_dice_loss_v1(outputs, targets, *, p=1, smooth=1.0):
    """JAX wrapper matching SoftDiceLossV1.forward. Returns a scalar float32."""
    assert outputs.shape == targets.shape
    n = outputs.size
    assert n > 0

    # Keep native dtypes; the kernel upcasts tile-by-tile in VMEM.
    o_flat = jnp.ravel(outputs)
    t_flat = jnp.ravel(targets)

    # Pad only when the element count is not a multiple of 128 (< 128 extra
    # elements). Padded elements are masked out inside the kernel.
    n_lanes = _round_up(n, LANES)
    if n_lanes != n:
        pad = n_lanes - n
        o_flat = jnp.concatenate([o_flat, jnp.zeros((pad,), o_flat.dtype)])
        t_flat = jnp.concatenate([t_flat, jnp.zeros((pad,), t_flat.dtype)])
    rows = n_lanes // LANES

    row_mult = max(_sublane_multiple(o_flat.dtype),
                   _sublane_multiple(t_flat.dtype))
    block_rows = min(MAX_BLOCK_ROWS, _round_up(rows, row_mult))
    nblocks = pl.cdiv(rows, block_rows)
    steps = pl.cdiv(nblocks, NUM_SLICES)
    covered = NUM_SLICES * steps * block_rows * LANES
    needs_mask = covered != n
    num_full_blocks = n // (block_rows * LANES)   # blocks with no invalid elems

    o2d = o_flat.reshape(rows, LANES)
    t2d = t_flat.reshape(rows, LANES)

    if NUM_SLICES * steps == nblocks:
        # Exact coverage: plain affine index map.
        def in_map(c, i):
            return (c * steps + i, 0)
    else:
        # Over-coverage (at most NUM_SLICES - 1 extra blocks): clamp the block
        # index so the DMA stays in bounds; the clamped blocks are fully
        # masked out in the kernel (their unclamped flat index >= n).
        def in_map(c, i):
            return (jnp.minimum(c * steps + i, nblocks - 1), 0)

    kernel = functools.partial(
        _soft_dice_kernel,
        p=p,
        n_valid=n,
        block_rows=block_rows,
        steps=steps,
        num_full_blocks=num_full_blocks,
        needs_mask=needs_mask,
    )

    out_num, out_den = pl.pallas_call(
        kernel,
        out_shape=(
            jax.ShapeDtypeStruct((NUM_SLICES, 8, LANES), jnp.float32),
            jax.ShapeDtypeStruct((NUM_SLICES, 8, LANES), jnp.float32),
        ),
        grid_spec=pltpu.PrefetchScalarGridSpec(
            num_scalar_prefetch=0,
            grid=(NUM_SLICES, steps),
            in_specs=[
                pl.BlockSpec((block_rows, LANES), in_map),
                pl.BlockSpec((block_rows, LANES), in_map),
            ],
            out_specs=(
                pl.BlockSpec((1, 8, LANES), lambda c, i: (c, 0, 0)),
                pl.BlockSpec((1, 8, LANES), lambda c, i: (c, 0, 0)),
            ),
            scratch_shapes=[
                pltpu.VMEM((block_rows, LANES), jnp.float32),
                pltpu.VMEM((block_rows, LANES), jnp.float32),
            ],
        ),
        compiler_params=pltpu.CompilerParams(
            dimension_semantics=("parallel", "arbitrary"),
        ),
    )(o2d, t2d)

    numer = jnp.sum(out_num[:, 0, 0])
    denor = jnp.sum(out_den[:, 0, 0])
    return 1.0 - (2.0 * numer + smooth) / (denor + smooth)


def _reference(outputs, targets, p=1, smooth=1.0):
    probs = jax.nn.sigmoid(outputs.astype(jnp.float32))
    t = targets.astype(jnp.float32)
    numer = jnp.sum(probs * t)
    denor = jnp.sum(probs ** p + t ** p)
    return 1.0 - (2.0 * numer + smooth) / (denor + smooth)


if __name__ == "__main__":
    key = jax.random.PRNGKey(0)
    k_o, k_t = jax.random.split(key)

    # Shapes implied by the module's docstring: (N, H, W, ...).
    x_shape = (2, 4, 16, 16)
    outputs = jax.random.normal(k_o, x_shape, dtype=jnp.float32)
    targets = (jax.random.uniform(k_t, x_shape) > 0.5).astype(jnp.float32)

    loss = soft_dice_loss_v1(outputs, targets, p=1, smooth=1.0)
    loss = jax.block_until_ready(loss)

    ref = _reference(outputs, targets, p=1, smooth=1.0)
    assert jnp.allclose(loss, ref, atol=1e-5, rtol=1e-5), (loss, ref)

    print("KERNEL_OK")
</pallas_src>

<mosaic_0001>
module attributes {stable_mosaic.version = 11 : i64} {
  func.func @_soft_dice_kernel(%arg0: i32, %arg1: i32, %arg2: memref<16x128xf32, #tpu.memory_space<vmem>>, %arg3: memref<16x128xf32, #tpu.memory_space<vmem>>, %arg4: memref<1x8x128xf32, #tpu.memory_space<vmem>>, %arg5: memref<1x8x128xf32, #tpu.memory_space<vmem>>, %arg6: memref<16x128xf32, #tpu.memory_space<vmem>>, %arg7: memref<16x128xf32, #tpu.memory_space<vmem>>) attributes {dimension_semantics = [#tpu.dimension_semantics<parallel>, #tpu.dimension_semantics<arbitrary>], iteration_bounds = array<i64: 2, 1>, scalar_prefetch = 0 : i64, scratch_operands = 2 : i64, tpu.core_type = #tpu.core_type<tc>, window_params = [{transform_indices = @transform_0, window_bounds = array<i64: 16, 128>}, {transform_indices = @transform_1, window_bounds = array<i64: 16, 128>}, {transform_indices = @transform_2, window_bounds = array<i64: 1, 8, 128>}, {transform_indices = @transform_3, window_bounds = array<i64: 1, 8, 128>}]} {
    %c1_i32 = arith.constant 1 : i32
    %0 = arith.muli %arg0, %c1_i32 : i32
    %1 = arith.addi %0, %arg1 : i32
    %c0_i32 = arith.constant 0 : i32
    %2 = arith.cmpi eq, %arg1, %c0_i32 : i32
    %3 = arith.extui %2 : i1 to i32
    %c0_i32_0 = arith.constant 0 : i32
    %4 = arith.cmpi ne, %3, %c0_i32_0 : i32
    scf.if %4 {
      %cst = arith.constant 0.000000e+00 : f32
      %14 = vector.broadcast %cst : f32 to vector<16x128xf32>
      %c0 = arith.constant 0 : index
      %c0_7 = arith.constant 0 : index
      %15 = vector.load %arg6[%c0, %c0_7] : memref<16x128xf32, #tpu.memory_space<vmem>>, vector<16x128xf32>
      tpu.vector_store %arg6[%c0, %c0_7], %14 {strides = array<i32>} : memref<16x128xf32, #tpu.memory_space<vmem>>, vector<16x128xf32>,
      %cst_8 = arith.constant 0.000000e+00 : f32
      %16 = vector.broadcast %cst_8 : f32 to vector<16x128xf32>
      %c0_9 = arith.constant 0 : index
      %c0_10 = arith.constant 0 : index
      %17 = vector.load %arg7[%c0_9, %c0_10] : memref<16x128xf32, #tpu.memory_space<vmem>>, vector<16x128xf32>
      tpu.vector_store %arg7[%c0_9, %c0_10], %16 {strides = array<i32>} : memref<16x128xf32, #tpu.memory_space<vmem>>, vector<16x128xf32>,
    } else {
    }
    %c1_i32_1 = arith.constant 1 : i32
    %5 = arith.cmpi slt, %1, %c1_i32_1 : i32
    %6 = arith.extui %5 : i1 to i32
    %c0_i32_2 = arith.constant 0 : i32
    %7 = arith.cmpi ne, %6, %c0_i32_2 : i32
    scf.if %7 {
      %c0 = arith.constant 0 : index
      %c0_7 = arith.constant 0 : index
      %14 = vector.load %arg2[%c0, %c0_7] : memref<16x128xf32, #tpu.memory_space<vmem>>, vector<16x128xf32>
      %15 = arith.negf %14 : vector<16x128xf32>
      %16 = math.exp %15 : vector<16x128xf32>
      %cst = arith.constant 1.000000e+00 : f32
      %17 = vector.broadcast %cst : f32 to vector<16x128xf32>
      %18 = arith.addf %17, %16 : vector<16x128xf32>
      %19 = arith.divf %17, %18 : vector<16x128xf32>
      %c0_8 = arith.constant 0 : index
      %c0_9 = arith.constant 0 : index
      %20 = vector.load %arg3[%c0_8, %c0_9] : memref<16x128xf32, #tpu.memory_space<vmem>>, vector<16x128xf32>
      %c0_10 = arith.constant 0 : index
      %c0_11 = arith.constant 0 : index
      %21 = vector.load %arg6[%c0_10, %c0_11] : memref<16x128xf32, #tpu.memory_space<vmem>>, vector<16x128xf32>
      %22 = arith.mulf %19, %20 : vector<16x128xf32>
      %23 = arith.addf %21, %22 : vector<16x128xf32>
      %c0_12 = arith.constant 0 : index
      %c0_13 = arith.constant 0 : index
      %24 = vector.load %arg6[%c0_12, %c0_13] : memref<16x128xf32, #tpu.memory_space<vmem>>, vector<16x128xf32>
      tpu.vector_store %arg6[%c0_12, %c0_13], %23 {strides = array<i32>} : memref<16x128xf32, #tpu.memory_space<vmem>>, vector<16x128xf32>,
      %c0_14 = arith.constant 0 : index
      %c0_15 = arith.constant 0 : index
      %25 = vector.load %arg7[%c0_14, %c0_15] : memref<16x128xf32, #tpu.memory_space<vmem>>, vector<16x128xf32>
      %26 = arith.addf %19, %20 : vector<16x128xf32>
      %27 = arith.addf %25, %26 : vector<16x128xf32>
      %c0_16 = arith.constant 0 : index
      %c0_17 = arith.constant 0 : index
      %28 = vector.load %arg7[%c0_16, %c0_17] : memref<16x128xf32, #tpu.memory_space<vmem>>, vector<16x128xf32>
      tpu.vector_store %arg7[%c0_16, %c0_17], %27 {strides = array<i32>} : memref<16x128xf32, #tpu.memory_space<vmem>>, vector<16x128xf32>,
    } else {
    }
    %c1_i32_3 = arith.constant 1 : i32
    %8 = arith.cmpi sge, %1, %c1_i32_3 : i32
    %9 = arith.extui %8 : i1 to i32
    %c0_i32_4 = arith.constant 0 : i32
    %10 = arith.cmpi ne, %9, %c0_i32_4 : i32
    scf.if %10 {
      %c0 = arith.constant 0 : index
      %c0_7 = arith.constant 0 : index
      %14 = vector.load %arg2[%c0, %c0_7] : memref<16x128xf32, #tpu.memory_space<vmem>>, vector<16x128xf32>
      %15 = arith.negf %14 : vector<16x128xf32>
      %16 = math.exp %15 : vector<16x128xf32>
      %cst = arith.constant 1.000000e+00 : f32
      %17 = vector.broadcast %cst : f32 to vector<16x128xf32>
      %18 = arith.addf %17, %16 : vector<16x128xf32>
      %19 = arith.divf %17, %18 : vector<16x128xf32>
      %c0_8 = arith.constant 0 : index
      %c0_9 = arith.constant 0 : index
      %20 = vector.load %arg3[%c0_8, %c0_9] : memref<16x128xf32, #tpu.memory_space<vmem>>, vector<16x128xf32>
      %21 = tpu.iota {dimensions = array<i32: 0>} : vector<16x128xi32>
      %22 = tpu.iota {dimensions = array<i32: 1>} : vector<16x128xi32>
      %c128_i32 = arith.constant 128 : i32
      %23 = vector.broadcast %c128_i32 : i32 to vector<16x128xi32>
      %24 = arith.muli %21, %23 : vector<16x128xi32>
      %25 = arith.addi %24, %22 : vector<16x128xi32>
      %c2048_i32 = arith.constant 2048 : i32
      %26 = arith.muli %1, %c2048_i32 : i32
      %c2048_i32_10 = arith.constant 2048 : i32
      %27 = arith.subi %c2048_i32_10, %26 : i32
      %28 = vector.broadcast %27 : i32 to vector<16x128xi32>
      %29 = arith.cmpi slt, %25, %28 : vector<16x128xi32>
      %cst_11 = arith.constant 0.000000e+00 : f32
      %30 = vector.broadcast %cst_11 : f32 to vector<16x128xf32>
      %31 = arith.select %29, %19, %30 : vector<16x128xi1>, vector<16x128xf32>
      %cst_12 = arith.constant 0.000000e+00 : f32
      %32 = vector.broadcast %cst_12 : f32 to vector<16x128xf32>
      %33 = arith.select %29, %20, %32 : vector<16x128xi1>, vector<16x128xf32>
      %c0_13 = arith.constant 0 : index
      %c0_14 = arith.constant 0 : index
      %34 = vector.load %arg6[%c0_13, %c0_14] : memref<16x128xf32, #tpu.memory_space<vmem>>, vector<16x128xf32>
      %35 = arith.mulf %31, %33 : vector<16x128xf32>
      %36 = arith.addf %34, %35 : vector<16x128xf32>
      %c0_15 = arith.constant 0 : index
      %c0_16 = arith.constant 0 : index
      %37 = vector.load %arg6[%c0_15, %c0_16] : memref<16x128xf32, #tpu.memory_space<vmem>>, vector<16x128xf32>
      tpu.vector_store %arg6[%c0_15, %c0_16], %36 {strides = array<i32>} : memref<16x128xf32, #tpu.memory_space<vmem>>, vector<16x128xf32>,
      %c0_17 = arith.constant 0 : index
      %c0_18 = arith.constant 0 : index
      %38 = vector.load %arg7[%c0_17, %c0_18] : memref<16x128xf32, #tpu.memory_space<vmem>>, vector<16x128xf32>
      %39 = arith.addf %31, %33 : vector<16x128xf32>
      %40 = arith.addf %38, %39 : vector<16x128xf32>
      %c0_19 = arith.constant 0 : index
      %c0_20 = arith.constant 0 : index
      %41 = vector.load %arg7[%c0_19, %c0_20] : memref<16x128xf32, #tpu.memory_space<vmem>>, vector<16x128xf32>
      tpu.vector_store %arg7[%c0_19, %c0_20], %40 {strides = array<i32>} : memref<16x128xf32, #tpu.memory_space<vmem>>, vector<16x128xf32>,
    } else {
    }
    %c0_i32_5 = arith.constant 0 : i32
    %11 = arith.cmpi eq, %arg1, %c0_i32_5 : i32
    %12 = arith.extui %11 : i1 to i32
    %c0_i32_6 = arith.constant 0 : i32
    %13 = arith.cmpi ne, %12, %c0_i32_6 : i32
    scf.if %13 {
      %c0 = arith.constant 0 : index
      %c0_7 = arith.constant 0 : index
      %14 = vector.load %arg6[%c0, %c0_7] : memref<16x128xf32, #tpu.memory_space<vmem>>, vector<16x128xf32>
      %15 = vector.shape_cast %14 : vector<16x128xf32> to vector<1x16x128xf32>
      %cst = arith.constant dense<0.000000e+00> : vector<1xf32>
      %16 = vector.multi_reduction <add>, %15, %cst [1, 2] : vector<1x16x128xf32> to vector<1xf32>
      %17 = vector.shape_cast %16 : vector<1xf32> to vector<1x1x1xf32>
      %18 = vector.extract %17[0, 0, 0] : f32 from vector<1x1x1xf32>
      %c0_8 = arith.constant 0 : index
      %c0_9 = arith.constant 0 : index
      %19 = vector.load %arg7[%c0_8, %c0_9] : memref<16x128xf32, #tpu.memory_space<vmem>>, vector<16x128xf32>
      %20 = vector.shape_cast %19 : vector<16x128xf32> to vector<1x16x128xf32>
      %cst_10 = arith.constant dense<0.000000e+00> : vector<1xf32>
      %21 = vector.multi_reduction <add>, %20, %cst_10 [1, 2] : vector<1x16x128xf32> to vector<1xf32>
      %22 = vector.shape_cast %21 : vector<1xf32> to vector<1x1x1xf32>
      %23 = vector.extract %22[0, 0, 0] : f32 from vector<1x1x1xf32>
      %24 = vector.broadcast %18 : f32 to vector<1x8x128xf32>
      %c0_11 = arith.constant 0 : index
      %c0_12 = arith.constant 0 : index
      %c0_13 = arith.constant 0 : index
      %25 = vector.load %arg4[%c0_11, %c0_12, %c0_13] : memref<1x8x128xf32, #tpu.memory_space<vmem>>, vector<1x8x128xf32>
      tpu.vector_store %arg4[%c0_11, %c0_12, %c0_13], %24 {strides = array<i32>} : memref<1x8x128xf32, #tpu.memory_space<vmem>>, vector<1x8x128xf32>,
      %26 = vector.broadcast %23 : f32 to vector<1x8x128xf32>
      %c0_14 = arith.constant 0 : index
      %c0_15 = arith.constant 0 : index
      %c0_16 = arith.constant 0 : index
      %27 = vector.load %arg5[%c0_14, %c0_15, %c0_16] : memref<1x8x128xf32, #tpu.memory_space<vmem>>, vector<1x8x128xf32>
      tpu.vector_store %arg5[%c0_14, %c0_15, %c0_16], %26 {strides = array<i32>} : memref<1x8x128xf32, #tpu.memory_space<vmem>>, vector<1x8x128xf32>,
    } else {
    }
    return
  }
  func.func @transform_0(%arg0: i32, %arg1: i32) -> (i32, i32) {
    %c1_i32 = arith.constant 1 : i32
    %0 = arith.muli %arg0, %c1_i32 : i32
    %1 = arith.addi %0, %arg1 : i32
    %c0_i32 = arith.constant 0 : i32
    %2 = arith.minsi %1, %c0_i32 : i32
    %c0_i32_0 = arith.constant 0 : i32
    %c0_i32_1 = arith.constant 0 : i32
    return %2, %c0_i32_0 : i32, i32
  }
  func.func @transform_1(%arg0: i32, %arg1: i32) -> (i32, i32) {
    %c1_i32 = arith.constant 1 : i32
    %0 = arith.muli %arg0, %c1_i32 : i32
    %1 = arith.addi %0, %arg1 : i32
    %c0_i32 = arith.constant 0 : i32
    %2 = arith.minsi %1, %c0_i32 : i32
    %c0_i32_0 = arith.constant 0 : i32
    %c0_i32_1 = arith.constant 0 : i32
    return %2, %c0_i32_0 : i32, i32
  }
  func.func @transform_2(%arg0: i32, %arg1: i32) -> (i32, i32, i32) {
    %c0_i32 = arith.constant 0 : i32
    %c0_i32_0 = arith.constant 0 : i32
    %c0_i32_1 = arith.constant 0 : i32
    return %arg0, %c0_i32, %c0_i32_0 : i32, i32, i32
  }
  func.func @transform_3(%arg0: i32, %arg1: i32) -> (i32, i32, i32) {
    %c0_i32 = arith.constant 0 : i32
    %c0_i32_0 = arith.constant 0 : i32
    %c0_i32_1 = arith.constant 0 : i32
    return %arg0, %c0_i32, %c0_i32_0 : i32, i32, i32
  }
}

</mosaic_0001>

<llo_original>
// kernel: soft_dice_loss_v1.1
$region0: #{soft_dice_loss_v1.1}
  #allocation0 [shape = 'u32[]', space=smem, size = 0x4, offset = 0x4, fixed_abs, tag = 'smem constant byte address 0x4 - core index']
  #allocation1 [shape = 'u32[144,128]{1,0:T(1,128)}', space=vmem, size = 0x12000, scoped, tag = 'internal scratch']
  #allocation2 [shape = 'f32[16,128]{1,0:T(8,128)}', space=vmem, size = 0x2000, scoped, tag = 'scratch operand']
  #allocation3 [shape = 'f32[16,128]{1,0:T(8,128)}', space=vmem, size = 0x2000, scoped, tag = 'scratch operand']
  %s0 = inlined_call_operand.vmem [shape: f32[16,128], index: 0, kind: input, shape index: {}]
  %s1 = inlined_call_operand.vmem [shape: f32[16,128], index: 1, kind: input, shape index: {}]
  %s2 = inlined_call_operand.vmem [shape: f32[2,8,128], index: 2, kind: output, shape index: {0}]
  %s3 = inlined_call_operand.vmem [shape: f32[2,8,128], index: 3, kind: output, shape index: {1}]
  %4 = xla_tuple %s2, %s3
  %s5 = sld [smem:[#allocation0]]
  $region65: #{soft_dice_loss_v1.1} parent=0
    _
  %s7 = ssub.s32 1, %s5
  %s8 = scalar_select 0, %s7, %s5
  loop: start=0, step=1, limit=4
  $region2: #{soft_dice_loss_v1.1} parent=0 // loop_pre_header
    _
  $region3: #{soft_dice_loss_v1.1} parent=0 // loop_header
    %s10 = sphi 0, %s14
    %p11 = scmp.ge.s32.totalorder %s10, 4
    %s17 = sphi 0, %s29
    %s18 = sphi 0, %s25
    %s19 = sphi 0, %s17
    %s20 = sphi 0, %s18
    %s21 = sphi 0, %s19
    %s22 = sphi 0, %s20
    %s38 = sphi 0, %s40
    %s41 = sphi 0, %s38
    %s42 = sphi 0, %s41
    %s58 = sphi 0, %s42
    %s70 = sphi 0, %s72
    %s73 = sphi 0, %s70
    %s74 = sphi 0, %s73
    %s90 = sphi 0, %s74
    %s96 = sphi 0, %s98
    %s99 = sphi 0, %s96
    %s100 = sphi 0, %s99
    %s116 = sphi 0, %s100
    %s122 = sphi 0, %s124
    %s125 = sphi 0, %s122
    %s126 = sphi 0, %s125
    %s142 = sphi 0, %s126
  $region4: #{soft_dice_loss_v1.1} parent=0 // loop_header_branch
    %13 = sbr.rel (%p11) target = $region8
  $region5: #{soft_dice_loss_v1.1} parent=0 // loop_body
    %s15 = ssub.s32 %s10, 1
    %s16 = ssub.s32 %s10, 2
    %s23 = sadd.s32 1, %s18
    %p24 = scmp.ge.s32.totalorder %s23, 1
    %s25 = scalar_select %p24, 0, %s23
    %s26 = sadd.s32 1, %s17
    %s27 = scalar_select %p24, %s26, %s17
    %p28 = scmp.ge.s32.totalorder %s27, 2
    %s29 = scalar_select %p28, 0, %s27
    %s30 = sadd.s32 %s17, %s18
    %p31 = scmp.lt.s32.totalorder %s30, 0
    %s32 = scalar_select %p31, %s30, 0
    %s33 = sadd.s32 %s29, %s25
    %p34 = scmp.lt.s32.totalorder %s33, 0
    %s35 = scalar_select %p34, %s33, 0
    %s36 = ssub.s32 %s32, %s35
    %p37 = scmp.eq.s32.totalorder %s36, 0
    %s39 = sadd.s32 %s38, 1
    %s40 = scalar_select %p37, %s38, %s39
    %p43 = pneg %p37
    %p44 = scmp.eq.s32.totalorder %s10, 1
    %p45 = por %p43, %p44
    %p46 = scmp.ne.s32.totalorder %s38, %s41
    %p47 = scmp.eq.s32.totalorder %s10, 0
    %p48 = por %p46, %p47
    %p49 = scmp.ne.s32.totalorder %s38, %s41
    %p50 = scmp.eq.s32.totalorder %s15, 1
    %p51 = por %p49, %p50
    %p52 = scmp.ne.s32.totalorder %s41, %s42
    %p53 = scmp.eq.s32.totalorder %s15, 0
    %p54 = por %p52, %p53
    %p55 = scmp.ne.s32.totalorder %s41, %s42
    %p56 = scmp.eq.s32.totalorder %s16, 1
    %p57 = por %p55, %p56
    %p59 = scmp.ne.s32.totalorder %s42, %s58
    %p60 = scmp.eq.s32.totalorder %s16, 0
    %p61 = por %p59, %p60
    %s62 = sadd.s32 %s17, %s18
    %p63 = scmp.lt.s32.totalorder %s62, 0
    %s64 = scalar_select %p63, %s62, 0
    %s65 = sadd.s32 %s29, %s25
    %p66 = scmp.lt.s32.totalorder %s65, 0
    %s67 = scalar_select %p66, %s65, 0
    %s68 = ssub.s32 %s64, %s67
    %p69 = scmp.eq.s32.totalorder %s68, 0
    %s71 = sadd.s32 %s70, 1
    %s72 = scalar_select %p69, %s70, %s71
    %p75 = pneg %p69
    %p76 = scmp.eq.s32.totalorder %s10, 1
    %p77 = por %p75, %p76
    %p78 = scmp.ne.s32.totalorder %s70, %s73
    %p79 = scmp.eq.s32.totalorder %s10, 0
    %p80 = por %p78, %p79
    %p81 = scmp.ne.s32.totalorder %s70, %s73
    %p82 = scmp.eq.s32.totalorder %s15, 1
    %p83 = por %p81, %p82
    %p84 = scmp.ne.s32.totalorder %s73, %s74
    %p85 = scmp.eq.s32.totalorder %s15, 0
    %p86 = por %p84, %p85
    %p87 = scmp.ne.s32.totalorder %s73, %s74
    %p88 = scmp.eq.s32.totalorder %s16, 1
    %p89 = por %p87, %p88
    %p91 = scmp.ne.s32.totalorder %s74, %s90
    %p92 = scmp.eq.s32.totalorder %s16, 0
    %p93 = por %p91, %p92
    %s94 = ssub.s32 %s17, %s29
    %p95 = scmp.eq.s32.totalorder %s94, 0
    %s97 = sadd.s32 %s96, 1
    %s98 = scalar_select %p95, %s96, %s97
    %p101 = pneg %p95
    %p102 = scmp.eq.s32.totalorder %s10, 1
    %p103 = por %p101, %p102
    %p104 = scmp.ne.s32.totalorder %s96, %s99
    %p105 = scmp.eq.s32.totalorder %s10, 0
    %p106 = por %p104, %p105
    %p107 = scmp.ne.s32.totalorder %s96, %s99
    %p108 = scmp.eq.s32.totalorder %s15, 1
    %p109 = por %p107, %p108
    %p110 = scmp.ne.s32.totalorder %s99, %s100
    %p111 = scmp.eq.s32.totalorder %s15, 0
    %p112 = por %p110, %p111
    %p113 = scmp.ne.s32.totalorder %s99, %s100
    %p114 = scmp.eq.s32.totalorder %s16, 1
    %p115 = por %p113, %p114
    %p117 = scmp.ne.s32.totalorder %s100, %s116
    %p118 = scmp.eq.s32.totalorder %s16, 0
    %p119 = por %p117, %p118
    %s120 = ssub.s32 %s17, %s29
    %p121 = scmp.eq.s32.totalorder %s120, 0
    %s123 = sadd.s32 %s122, 1
    %s124 = scalar_select %p121, %s122, %s123
    %p127 = pneg %p121
    %p128 = scmp.eq.s32.totalorder %s10, 1
    %p129 = por %p127, %p128
    %p130 = scmp.ne.s32.totalorder %s122, %s125
    %p131 = scmp.eq.s32.totalorder %s10, 0
    %p132 = por %p130, %p131
    %p133 = scmp.ne.s32.totalorder %s122, %s125
    %p134 = scmp.eq.s32.totalorder %s15, 1
    %p135 = por %p133, %p134
    %p136 = scmp.ne.s32.totalorder %s125, %s126
    %p137 = scmp.eq.s32.totalorder %s15, 0
    %p138 = por %p136, %p137
    %p139 = scmp.ne.s32.totalorder %s125, %s126
    %p140 = scmp.eq.s32.totalorder %s16, 1
    %p141 = por %p139, %p140
    %p143 = scmp.ne.s32.totalorder %s126, %s142
    %p144 = scmp.eq.s32.totalorder %s16, 0
    %p145 = por %p143, %p144
    %p146 = scmp.le.s32.totalorder 1, %s10
    %p147 = scmp.lt.s32.totalorder %s10, 3
    %p148 = pnand %p146, %p147
    %p149 = pneg %p148
    // Predicated region
    $region9: #{soft_dice_loss_v1.1} parent=5 // pred_check
      _
    $region10: #{soft_dice_loss_v1.1} parent=5 // pred_check_branch
      %151 = sbr.rel (%p148) target = $region12
    $region11: #{soft_dice_loss_v1.1} parent=5 // pred_region
      %s152 = ssub.s32 %s10, 1
    $region12: #{soft_dice_loss_v1.1} parent=5 // pred_fallthru
      _
    %p153 = scmp.lt.s32.totalorder %s10, 2
    // Predicated region
    $region13: #{soft_dice_loss_v1.1} parent=5 // pred_check
      %p154 = pneg %p153
    $region14: #{soft_dice_loss_v1.1} parent=5 // pred_check_branch
      %156 = sbr.rel (%p154) target = $region16
    $region15: #{soft_dice_loss_v1.1} parent=5 // pred_region
      // Predicated region
      $region17: #{soft_dice_loss_v1.1} parent=15 // pred_check
        %p157 = pneg %p48
      $region18: #{soft_dice_loss_v1.1} parent=15 // pred_check_branch
        %159 = sbr.rel (%p157) target = $region20
      $region19: #{soft_dice_loss_v1.1} parent=15 // pred_region
        %s160 = sadd.s32 %s17, %s18
        %p161 = scmp.lt.s32.totalorder %s160, 0
        %s162 = scalar_select %p161, %s160, 0
        %s163 = smul.u32 2, %s162
        %p164 = scmp.lt.s32.totalorder %s163, 1
        %s165 = scalar_select %p164, %s163, 1
        %s166 = smul.addr %s165, 8
        %s167 = scalar_lea.vmem %s0, %s166
        %s168 = sadd.s32 %s17, %s18
        %p169 = scmp.lt.s32.totalorder %s168, 0
        %s170 = scalar_select %p169, %s168, 0
        %s171 = smul.u32 2, %s170
      $region20: #{soft_dice_loss_v1.1} parent=15 // pred_fallthru
        _
      // Predicated region
      $region21: #{soft_dice_loss_v1.1} parent=15 // pred_check
        %p172 = pneg %p80
      $region22: #{soft_dice_loss_v1.1} parent=15 // pred_check_branch
        %174 = sbr.rel (%p172) target = $region24
      $region23: #{soft_dice_loss_v1.1} parent=15 // pred_region
        %s175 = sadd.s32 %s17, %s18
        %p176 = scmp.lt.s32.totalorder %s175, 0
        %s177 = scalar_select %p176, %s175, 0
        %s178 = smul.u32 2, %s177
        %p179 = scmp.lt.s32.totalorder %s178, 1
        %s180 = scalar_select %p179, %s178, 1
        %s181 = smul.addr %s180, 8
        %s182 = scalar_lea.vmem %s1, %s181
        %s183 = sadd.s32 %s17, %s18
        %p184 = scmp.lt.s32.totalorder %s183, 0
        %s185 = scalar_select %p184, %s183, 0
        %s186 = smul.u32 2, %s185
      $region24: #{soft_dice_loss_v1.1} parent=15 // pred_fallthru
        _
    $region16: #{soft_dice_loss_v1.1} parent=5 // pred_fallthru
      _
    %p187 = scmp.le.s32.totalorder 1, %s10
    %p188 = scmp.lt.s32.totalorder %s10, 3
    %p189 = pnand %p187, %p188
    %p190 = pneg %p189
    // Predicated region
    $region25: #{soft_dice_loss_v1.1} parent=5 // pred_check
      _
    $region26: #{soft_dice_loss_v1.1} parent=5 // pred_check_branch
      %192 = sbr.rel (%p189) target = $region28
    $region27: #{soft_dice_loss_v1.1} parent=5 // pred_region
      %s193 = ssub.s32 %s10, 1
      %s194 = sadd.s32 %s19, %s20
      %p195 = scmp.lt.s32.totalorder %s194, 0
      %s196 = scalar_select %p195, %s194, 0
      %s197 = smul.u32 2, %s196
      %p198 = scmp.lt.s32.totalorder %s197, 1
      %s199 = scalar_select %p198, %s197, 1
      %s200 = smul.addr %s199, 8
      %s201 = scalar_lea.vmem %s0, %s200
      %p202 = pneg %p54
      %p203 = pneg %p51
      %s204 = sadd.s32 %s19, %s20
      %p205 = scmp.lt.s32.totalorder %s204, 0
      %s206 = scalar_select %p205, %s204, 0
      %s207 = smul.u32 2, %s206
      %p208 = scmp.lt.s32.totalorder %s207, 1
      %s209 = scalar_select %p208, %s207, 1
      %s210 = smul.addr %s209, 8
      %s211 = scalar_lea.vmem %s1, %s210
      %p212 = pneg %p86
      %p213 = pneg %p83
      %p214 = pneg %p112
      %p215 = pneg %p109
      %p216 = scmp.lt.s32.totalorder %s19, 1
      %s217 = scalar_select %p216, %s19, 1
      %s218 = smul.addr %s217, 8
      %s219 = scalar_lea.vmem %s2, %s218
      %p220 = pneg %p138
      %p221 = pneg %p135
      %p222 = scmp.lt.s32.totalorder %s19, 1
      %s223 = scalar_select %p222, %s19, 1
      %s224 = smul.addr %s223, 8
      %s225 = scalar_lea.vmem %s3, %s224
      %s226 = sadd.s32 %s19, %s20
      %p227 = scmp.lt.s32.totalorder %s226, 0
      %s228 = scalar_select %p227, %s226, 0
      %s229 = smul.u32 2, %s228
      %p230 = scmp.lt.s32.totalorder %s229, 1
      %s231 = scalar_select %p230, %s229, 1
      %s232 = smul.addr %s231, 8
      %s233 = scalar_lea.vmem %s0, %s232
      %s234 = sadd.s32 %s19, %s20
      %p235 = scmp.lt.s32.totalorder %s234, 0
      %s236 = scalar_select %p235, %s234, 0
      %s237 = smul.u32 2, %s236
      %s238 = sadd.s32 %s19, %s20
      %p239 = scmp.lt.s32.totalorder %s238, 0
      %s240 = scalar_select %p239, %s238, 0
      %s241 = smul.u32 2, %s240
      %p242 = scmp.lt.s32.totalorder %s241, 1
      %s243 = scalar_select %p242, %s241, 1
      %s244 = smul.addr %s243, 8
      %s245 = scalar_lea.vmem %s1, %s244
      %s246 = sadd.s32 %s19, %s20
      %p247 = scmp.lt.s32.totalorder %s246, 0
      %s248 = scalar_select %p247, %s246, 0
      %s249 = smul.u32 2, %s248
      %p250 = scmp.lt.s32.totalorder %s19, 1
      %s251 = scalar_select %p250, %s19, 1
      %s252 = smul.addr %s251, 8
      %s253 = scalar_lea.vmem %s2, %s252
      %p254 = scmp.lt.s32.totalorder %s19, 1
      %s255 = scalar_select %p254, %s19, 1
      %s256 = smul.addr %s255, 8
      %s257 = scalar_lea.vmem %s3, %s256
      %s258 = sadd.s32 %s19, %s20
      %p259 = scmp.eq.s32.totalorder %s20, 0
      // Predicated region
      $region29: #{soft_dice_loss_v1.1} parent=27 // pred_check
        %p260 = pneg %p259
      $region30: #{soft_dice_loss_v1.1} parent=27 // pred_check_branch
        %262 = sbr.rel (%p260) target = $region32
      $region31: #{soft_dice_loss_v1.1} parent=27 // pred_region
        %263 = vst [vmem:[#allocation2] sm:$0xff] 0.0
        %264 = vst [vmem:[#allocation2 + $0x8] sm:$0xff] 0.0
        %265 = vst [vmem:[#allocation3] sm:$0xff] 0.0
        %266 = vst [vmem:[#allocation3 + $0x8] sm:$0xff] 0.0
      $region32: #{soft_dice_loss_v1.1} parent=27 // pred_fallthru
        _
      %p267 = scmp.lt.s32.totalorder %s258, 1
      // Predicated region
      $region33: #{soft_dice_loss_v1.1} parent=27 // pred_check
        %p268 = pneg %p267
      $region34: #{soft_dice_loss_v1.1} parent=27 // pred_check_branch
        %270 = sbr.rel (%p268) target = $region36
      $region35: #{soft_dice_loss_v1.1} parent=27 // pred_region
        %v271 = vld [vmem:[%s233] sm:$0xff]
        %v272 = vld [vmem:[%s233 + $0x8] sm:$0xff]
        %v273 = vxor.u32 %v271, 2147483648
        %v274 = vxor.u32 %v272, 2147483648
        %v275 = vmul.f32 %v273, 1.442695
        %v276 = vpow.pop %v275
        %v277 = vmul.f32 %v274, 1.442695
        %v278 = vpow.pop %v277
        %v279 = vadd.f32 %v276, 1.0
        %v280 = vadd.f32 %v278, 1.0
        %v281 = vrcp.pop %v279
        %v282 = vmul.f32 1.0, %v281
        %v283 = vrcp.pop %v280
        %v284 = vmul.f32 1.0, %v283
        %v285 = vld [vmem:[%s245] sm:$0xff]
        %v286 = vld [vmem:[%s245 + $0x8] sm:$0xff]
        %v287 = vld [vmem:[#allocation2] sm:$0xff]
        %v288 = vld [vmem:[#allocation2 + $0x8] sm:$0xff]
        %v289 = vmul.f32 %v282, %v285
        %v290 = vmul.f32 %v284, %v286
        %v291 = vadd.f32 %v287, %v289
        %v292 = vadd.f32 %v288, %v290
        %293 = vst [vmem:[#allocation2] sm:$0xff] %v291
        %294 = vst [vmem:[#allocation2 + $0x8] sm:$0xff] %v292
        %v295 = vld [vmem:[#allocation3] sm:$0xff]
        %v296 = vld [vmem:[#allocation3 + $0x8] sm:$0xff]
        %v297 = vadd.f32 %v282, %v285
        %v298 = vadd.f32 %v284, %v286
        %v299 = vadd.f32 %v295, %v297
        %v300 = vadd.f32 %v296, %v298
        %301 = vst [vmem:[#allocation3] sm:$0xff] %v299
        %302 = vst [vmem:[#allocation3 + $0x8] sm:$0xff] %v300
      $region36: #{soft_dice_loss_v1.1} parent=27 // pred_fallthru
        _
      %p303 = scmp.ge.s32.totalorder %s258, 1
      // Predicated region
      $region37: #{soft_dice_loss_v1.1} parent=27 // pred_check
        %p304 = pneg %p303
      $region38: #{soft_dice_loss_v1.1} parent=27 // pred_check_branch
        %306 = sbr.rel (%p304) target = $region40
      $region39: #{soft_dice_loss_v1.1} parent=27 // pred_region
        %v307 = vld [vmem:[%s233] sm:$0xff]
        %v308 = vld [vmem:[%s233 + $0x8] sm:$0xff]
        %v309 = vxor.u32 %v307, 2147483648
        %v310 = vxor.u32 %v308, 2147483648
        %v311 = vmul.f32 %v309, 1.442695
        %v312 = vpow.pop %v311
        %v313 = vmul.f32 %v310, 1.442695
        %v314 = vpow.pop %v313
        %v315 = vadd.f32 %v312, 1.0
        %v316 = vadd.f32 %v314, 1.0
        %v317 = vrcp.pop %v315
        %v318 = vmul.f32 1.0, %v317
        %v319 = vrcp.pop %v316
        %v320 = vmul.f32 1.0, %v319
        %v321 = vld [vmem:[%s245] sm:$0xff]
        %v322 = vld [vmem:[%s245 + $0x8] sm:$0xff]
        %v323 = vlaneseq
        %v324 = vshrl.u32 %v323, 7
        %v325 = vadd.s32 %v324, 8
        %v326 = vlaneseq
        %v327 = vand.u32 %v326, 127
        %v328 = vmul.u32 %v324, 128
        %v329 = vmul.u32 %v325, 128
        %v330 = vadd.s32 %v328, %v327
        %v331 = vadd.s32 %v329, %v327
        %s332 = smul.u32 %s258, 2048
        %s333 = ssub.s32 2048, %s332
        %v334 = vstv %s333
        %vm335 = vcmp.lt.s32.totalorder %v330, %v334
        %vm336 = vcmp.lt.s32.totalorder %v331, %v334
        %v337 = vsel %vm335, %v318, 0.0
        %v338 = vsel %vm336, %v320, 0.0
        %v339 = vsel %vm335, %v321, 0.0
        %v340 = vsel %vm336, %v322, 0.0
        %v341 = vld [vmem:[#allocation2] sm:$0xff]
        %v342 = vld [vmem:[#allocation2 + $0x8] sm:$0xff]
        %v343 = vmul.f32 %v337, %v339
        %v344 = vmul.f32 %v338, %v340
        %v345 = vadd.f32 %v341, %v343
        %v346 = vadd.f32 %v342, %v344
        %347 = vst [vmem:[#allocation2] sm:$0xff] %v345
        %348 = vst [vmem:[#allocation2 + $0x8] sm:$0xff] %v346
        %v349 = vld [vmem:[#allocation3] sm:$0xff]
        %v350 = vld [vmem:[#allocation3 + $0x8] sm:$0xff]
        %v351 = vadd.f32 %v337, %v339
        %v352 = vadd.f32 %v338, %v340
        %v353 = vadd.f32 %v349, %v351
        %v354 = vadd.f32 %v350, %v352
        %355 = vst [vmem:[#allocation3] sm:$0xff] %v353
        %356 = vst [vmem:[#allocation3 + $0x8] sm:$0xff] %v354
      $region40: #{soft_dice_loss_v1.1} parent=27 // pred_fallthru
        _
      // Predicated region
      $region41: #{soft_dice_loss_v1.1} parent=27 // pred_check
        %p357 = pneg %p259
      $region42: #{soft_dice_loss_v1.1} parent=27 // pred_check_branch
        %359 = sbr.rel (%p357) target = $region44
      $region43: #{soft_dice_loss_v1.1} parent=27 // pred_region
        %v360 = vld [vmem:[#allocation2] sm:$0xff]
        %v361 = vld [vmem:[#allocation2 + $0x8] sm:$0xff]
        %v362 = vadd.f32 %v360, %v361
        %363 = vadd.xlane.f32.xlu0 %v362
        %v364 = vpop.xlane.xlu0 %363
        %v365 = vrot.slane %v364, 4
        %v366 = vadd.f32 %v364, %v365
        %v367 = vrot.slane %v366, 2
        %v368 = vadd.f32 %v366, %v367
        %v369 = vrot.slane %v368, 1
        %v370 = vadd.f32 %v368, %v369
        %s371 = vtos %v370
        %v372 = vld [vmem:[#allocation3] sm:$0xff]
        %v373 = vld [vmem:[#allocation3 + $0x8] sm:$0xff]
        %v374 = vadd.f32 %v372, %v373
        %375 = vadd.xlane.f32.xlu0 %v374
        %v376 = vpop.xlane.xlu0 %375
        %v377 = vrot.slane %v376, 4
        %v378 = vadd.f32 %v376, %v377
        %v379 = vrot.slane %v378, 2
        %v380 = vadd.f32 %v378, %v379
        %v381 = vrot.slane %v380, 1
        %v382 = vadd.f32 %v380, %v381
        %s383 = vtos %v382
        %v384 = vstv %s371
        %385 = vst [vmem:[%s253] sm:$0xff] %v384
        %v386 = vstv %s383
        %387 = vst [vmem:[%s257] sm:$0xff] %v386
      $region44: #{soft_dice_loss_v1.1} parent=27 // pred_fallthru
        _
      %p388 = scmp.lt.s32.totalorder %s19, 1
      %s389 = scalar_select %p388, %s19, 1
      %s390 = smul.addr %s389, 8
      %s391 = scalar_lea.vmem %s2, %s390
      %p392 = scmp.lt.s32.totalorder %s19, 1
      %s393 = scalar_select %p392, %s19, 1
      %s394 = smul.addr %s393, 8
      %s395 = scalar_lea.vmem %s3, %s394
      // Predicated region
      $region45: #{soft_dice_loss_v1.1} parent=27 // pred_check
        %p396 = pneg %p109
      $region46: #{soft_dice_loss_v1.1} parent=27 // pred_check_branch
        %398 = sbr.rel (%p396) target = $region48
      $region47: #{soft_dice_loss_v1.1} parent=27 // pred_region
        _
      $region48: #{soft_dice_loss_v1.1} parent=27 // pred_fallthru
        _
      // Predicated region
      $region49: #{soft_dice_loss_v1.1} parent=27 // pred_check
        %p399 = pneg %p135
      $region50: #{soft_dice_loss_v1.1} parent=27 // pred_check_branch
        %401 = sbr.rel (%p399) target = $region52
      $region51: #{soft_dice_loss_v1.1} parent=27 // pred_region
        _
      $region52: #{soft_dice_loss_v1.1} parent=27 // pred_fallthru
        _
    $region28: #{soft_dice_loss_v1.1} parent=5 // pred_fallthru
      _
    %p402 = scmp.le.s32.totalorder 2, %s10
    // Predicated region
    $region53: #{soft_dice_loss_v1.1} parent=5 // pred_check
      %p403 = pneg %p402
    $region54: #{soft_dice_loss_v1.1} parent=5 // pred_check_branch
      %405 = sbr.rel (%p403) target = $region56
    $region55: #{soft_dice_loss_v1.1} parent=5 // pred_region
      %s406 = ssub.s32 %s10, 2
      // Predicated region
      $region57: #{soft_dice_loss_v1.1} parent=55 // pred_check
        %p407 = pneg %p115
      $region58: #{soft_dice_loss_v1.1} parent=55 // pred_check_branch
        %409 = sbr.rel (%p407) target = $region60
      $region59: #{soft_dice_loss_v1.1} parent=55 // pred_region
        %p410 = scmp.lt.s32.totalorder %s21, 1
        %s411 = scalar_select %p410, %s21, 1
        %s412 = smul.addr %s411, 8
        %s413 = scalar_lea.vmem %s2, %s412
      $region60: #{soft_dice_loss_v1.1} parent=55 // pred_fallthru
        _
      // Predicated region
      $region61: #{soft_dice_loss_v1.1} parent=55 // pred_check
        %p414 = pneg %p141
      $region62: #{soft_dice_loss_v1.1} parent=55 // pred_check_branch
        %416 = sbr.rel (%p414) target = $region64
      $region63: #{soft_dice_loss_v1.1} parent=55 // pred_region
        %p417 = scmp.lt.s32.totalorder %s21, 1
        %s418 = scalar_select %p417, %s21, 1
        %s419 = smul.addr %s418, 8
        %s420 = scalar_lea.vmem %s3, %s419
      $region64: #{soft_dice_loss_v1.1} parent=55 // pred_fallthru
        _
    $region56: #{soft_dice_loss_v1.1} parent=5 // pred_fallthru
      _
  $region6: #{soft_dice_loss_v1.1} parent=0 // loop_footer
    %s14 = sadd.s32 1, %s10
  $region7: #{soft_dice_loss_v1.1} parent=0 // loop_footer_branch
    %9 = sbr.rel target = $region3
  $region8: #{soft_dice_loss_v1.1} parent=0 // loop_exit
    _

</llo_original>
